<compile_context>
chip_gen: v5e
topology: v5e:2x2
jax: 0.10.0
libtpu: 0.0.40
codegen_flags: <defaults>
</compile_context>

<pallas_src>
import functools

import jax
import jax.numpy as jnp
from jax.experimental import pallas as pl
from jax.experimental.pallas import tpu as pltpu


def _round_up(n, q):
    return ((n + q - 1) // q) * q


def _pick_tile(n, cap, quantum):
    """Largest tile <= cap that divides n and is a multiple of `quantum`;
    falls back to the full dim (always a legal block size)."""
    if n <= cap:
        return n
    t = (cap // quantum) * quantum
    while t >= quantum:
        if n % t == 0:
            return t
        t -= quantum
    return n


def _stage1_tiles(B, N, Finp, Fpad, a_bytes, x_bytes, budget=12 * 1024 * 1024):
    """Pick (tm, tk, bb) for stage 1 under a rough VMEM budget (fits v5e's 16 MiB
    scoped default and v7x's smaller physical VMEM with headroom)."""
    tm_cap, tk_cap = 256, 512
    while True:
        tm = _pick_tile(N, tm_cap, 8)
        tk = _pick_tile(N, tk_cap, 128)
        bb = max(1, min(B, max(1, 256 // tm)))
        while B % bb:
            bb -= 1
        # v7x megacore: keep >= 2 parallel grid steps when B >= 2 and the row axis
        # has only one tile (don't let bb swallow all of B).
        if B >= 2 and (N // tm) == 1 and bb >= B:
            bb = max(1, B // 2)
            while B % bb:
                bb -= 1
        est = (2 * bb * tm * tk * a_bytes        # A blocks (double-buffered, raw dtype)
               + 2 * bb * tk * Finp * x_bytes    # x blocks
               + 2 * Finp * Fpad * 4             # W (f32, resident)
               + 2 * bb * tm * Fpad * 2          # h blocks (bf16)
               + bb * tm * Finp * 4)             # f32 accumulator scratch
        if est <= budget or (tm_cap <= 8 and tk_cap <= 128):
            return tm, tk, bb
        if tk_cap > 128:
            tk_cap //= 2
        else:
            tm_cap = max(8, tm_cap // 2)


# ---------------------------------------------------------------------------
# Stage 1: fused  h = (A @ x) @ W  plus per-(batch-block,row-tile) BN statistics.
# grid = (B//bb, N//tm, N//tk); node contraction k is innermost ("arbitrary").
# ---------------------------------------------------------------------------
def gcn_stage1_kernel(a_ref, x_ref, w_ref, h_ref, stats_ref, c_acc,
                      *, tk, x_resident, compute_dtype):
    k = pl.program_id(2)
    nk = pl.num_programs(2)

    @pl.when(k == 0)
    def _():
        c_acc[...] = jnp.zeros_like(c_acc)

    # Cast A / x tiles to the MXU compute dtype in-kernel (no wrapper HBM cast pass).
    a = a_ref[...].astype(compute_dtype)
    if x_resident:
        start = pl.multiple_of(k * tk, tk)
        xk = x_ref[:, pl.ds(start, tk), :]
    else:
        xk = x_ref[...]
    xk = xk.astype(compute_dtype)

    # Partial batched product A[b, rows, kcols] @ x[b, kcols, :], f32 accumulation.
    c_acc[...] += jnp.einsum("bij,bjf->bif", a, xk,
                             preferred_element_type=jnp.float32)

    @pl.when(k == nk - 1)
    def _():
        bb, tm, finp = c_acc.shape
        # Flatten (batch block, row tile) onto the MXU M dim; f32 projection against
        # the resident f32 W avoids a second bf16 rounding of c.
        c = c_acc[...].reshape(bb * tm, finp)
        h = jnp.dot(c, w_ref[...], preferred_element_type=jnp.float32)  # (bb*tm, Fpad)
        h_ref[...] = h.reshape(bb, tm, h.shape[-1]).astype(h_ref.dtype)

        # Per-tile partial sums for training-mode BatchNorm statistics (reduced in
        # the wrapper) — no cross-tile accumulation, so ri stays megacore-parallel.
        s = jnp.sum(h, axis=0, keepdims=True)        # (1, Fpad)
        ss = jnp.sum(h * h, axis=0, keepdims=True)   # (1, Fpad)
        stats_ref[...] = jnp.concatenate([s, ss], axis=0)[None, None]


# ---------------------------------------------------------------------------
# Stage 2: y = relu(h * scale + shift) — pure FMA + max stream, big tiles.
# ---------------------------------------------------------------------------
def gcn_stage2_kernel(h_ref, scale_ref, shift_ref, y_ref, *, fout):
    y = h_ref[...].astype(jnp.float32) * scale_ref[...] + shift_ref[...]
    y = jnp.maximum(y, 0.0)
    y_ref[...] = y[:, :fout].astype(y_ref.dtype)


def gcn_layer_forward(x, A, W, b, gamma, beta, *, eps=1e-5):
    """x: [B, N, Fin], A: [B, N, N], W: [Fin, Fout], b/gamma/beta: [Fout]."""
    # The Linear bias is exactly cancelled by training-mode BatchNorm mean subtraction.
    del b

    B, N, Fin = x.shape
    Fout = W.shape[1]
    Fpad = _round_up(Fout, 128)    # lane-dense feature slab for h / W columns
    Finp = _round_up(Fin, 128)     # lane-dense contraction dim for the projection
    out_dtype = x.dtype
    compute_dtype = jnp.bfloat16   # MXU inputs for the big bmm (f32 accumulation)

    # Zero-padding is exact: padded Fin rows of W are zero; padded Fout columns make
    # h exactly 0 and are sliced off inside stage 2.
    Wp = jnp.zeros((Finp, Fpad), jnp.float32).at[:Fin, :Fout].set(W.astype(jnp.float32))
    gp = jnp.zeros((Fpad,), jnp.float32).at[:Fout].set(gamma.astype(jnp.float32))
    bp = jnp.zeros((Fpad,), jnp.float32).at[:Fout].set(beta.astype(jnp.float32))
    x_in = x if Finp == Fin else jnp.pad(x, ((0, 0), (0, 0), (0, Finp - Fin)))
    # A is passed through untouched; tiles are cast to bf16 inside the kernel.

    a_bytes = jnp.dtype(A.dtype).itemsize
    x_bytes = jnp.dtype(x_in.dtype).itemsize
    tm, tk, bb = _stage1_tiles(B, N, Finp, Fpad, a_bytes, x_bytes)
    Bb, nrt, nkt = B // bb, N // tm, N // tk
    # Keep x resident across row tiles (fetched once per batch block) when it fits.
    x_resident = (2 * bb * N * Finp * x_bytes) <= (6 * 1024 * 1024)
    # TODO(synk): an N with no usable tile divisor falls back to full-dim blocks; a
    # masked remainder path would be needed for very large prime-ish N.

    x_spec = (pl.BlockSpec((bb, N, Finp), lambda bi, ri, ki: (bi, 0, 0))
              if x_resident else
              pl.BlockSpec((bb, tk, Finp), lambda bi, ri, ki: (bi, ki, 0)))

    h, stats = pl.pallas_call(
        functools.partial(gcn_stage1_kernel, tk=tk, x_resident=x_resident,
                          compute_dtype=compute_dtype),
        out_shape=(
            jax.ShapeDtypeStruct((B, N, Fpad), jnp.bfloat16),      # h slab (bf16)
            jax.ShapeDtypeStruct((Bb, nrt, 2, Fpad), jnp.float32),  # per-tile BN stats
        ),
        grid_spec=pltpu.PrefetchScalarGridSpec(
            num_scalar_prefetch=0,
            grid=(Bb, nrt, nkt),
            in_specs=[
                pl.BlockSpec((bb, tm, tk), lambda bi, ri, ki: (bi, ri, ki)),
                x_spec,
                pl.BlockSpec((Finp, Fpad), lambda bi, ri, ki: (0, 0)),
            ],
            out_specs=[
                pl.BlockSpec((bb, tm, Fpad), lambda bi, ri, ki: (bi, ri, 0)),
                pl.BlockSpec((1, 1, 2, Fpad), lambda bi, ri, ki: (bi, ri, 0, 0)),
            ],
            scratch_shapes=[pltpu.VMEM((bb, tm, Finp), jnp.float32)],
        ),
        compiler_params=pltpu.CompilerParams(
            dimension_semantics=("parallel", "parallel", "arbitrary"),
            vmem_limit_bytes=32 * 1024 * 1024),
    )(A, x_in, Wp)

    # Fold the tiny per-tile stats into BN scale/shift once (trivial XLA ops on
    # (Fpad,)-sized arrays) so stage 2 is a pure normalize+ReLU stream.
    count = float(B * N)
    s = jnp.sum(stats[:, :, 0, :], axis=(0, 1))
    ss = jnp.sum(stats[:, :, 1, :], axis=(0, 1))
    mean = s / count
    var = jnp.maximum(ss / count - mean * mean, 0.0)   # biased (training-mode) variance
    inv = jax.lax.rsqrt(var + eps)
    scale = (gp * inv).reshape(1, Fpad)
    shift = (bp - mean * gp * inv).reshape(1, Fpad)

    rows = B * N
    h2 = h.reshape(rows, Fpad)                 # contiguous reshape: free
    tr = _pick_tile(rows, 1024, 8)             # big tiles for the memory-bound pass

    y_flat = pl.pallas_call(
        functools.partial(gcn_stage2_kernel, fout=Fout),
        out_shape=jax.ShapeDtypeStruct((rows, Fout), out_dtype),
        grid_spec=pltpu.PrefetchScalarGridSpec(
            num_scalar_prefetch=0,
            grid=(rows // tr,),
            in_specs=[
                pl.BlockSpec((tr, Fpad), lambda i: (i, 0)),
                pl.BlockSpec((1, Fpad), lambda i: (0, 0)),
                pl.BlockSpec((1, Fpad), lambda i: (0, 0)),
            ],
            out_specs=pl.BlockSpec((tr, Fout), lambda i: (i, 0)),
        ),
        compiler_params=pltpu.CompilerParams(
            dimension_semantics=("parallel",),
            vmem_limit_bytes=32 * 1024 * 1024),
    )(h2, scale, shift)

    y = y_flat.reshape(B, N, Fout)
    return [y, A]


def _reference(x, A, W, b, gamma, beta, eps=1e-5):
    c = jnp.einsum("bij,bjf->bif", A, x)
    h = jnp.einsum("bif,fo->bio", c, W) + b
    mean = jnp.mean(h, axis=(0, 1), keepdims=True)
    var = jnp.mean((h - mean) ** 2, axis=(0, 1), keepdims=True)
    y = (h - mean) / jnp.sqrt(var + eps) * gamma + beta
    return jnp.maximum(y, 0.0)


if __name__ == "__main__":
    # Small shapes implied by the forward: x [B, N, in_features], A [B, N, N]
    B, N, Fin, Fout = 2, 8, 16, 32

    key = jax.random.PRNGKey(0)
    kx, ka, kw, kb = jax.random.split(key, 4)

    x = jax.random.normal(kx, (B, N, Fin), dtype=jnp.float32)
    A = jax.random.uniform(ka, (B, N, N), dtype=jnp.float32)

    # Deterministic parameter init (mimics nn.Linear uniform(-1/sqrt(Fin), 1/sqrt(Fin)))
    bound = 1.0 / (Fin ** 0.5)
    W_torch = jax.random.uniform(kw, (Fout, Fin), minval=-bound, maxval=bound,
                                 dtype=jnp.float32)            # torch layout [out, in]
    W = W_torch.T                                              # kernel layout [in, out]
    b = jax.random.uniform(kb, (Fout,), minval=-bound, maxval=bound, dtype=jnp.float32)
    gamma = jnp.ones((Fout,), dtype=jnp.float32)               # BatchNorm1d default weight
    beta = jnp.zeros((Fout,), dtype=jnp.float32)               # BatchNorm1d default bias

    y, A_out = gcn_layer_forward(x, A, W, b, gamma, beta)
    jax.block_until_ready(y)
    jax.block_until_ready(A_out)

    assert y.shape == (B, N, Fout) and A_out.shape == (B, N, N)

    # Correctness check against a pure-JAX f32 reference (bf16 MXU inputs for the bmm,
    # f32 accumulation/projection, bf16 h storage -> loose-ish tolerance).
    y_ref = _reference(x, A, W, b, gamma, beta)
    err = float(jnp.max(jnp.abs(y - y_ref)))
    assert err < 1e-1, f"max abs err {err} exceeds tol 1e-1"

    print("KERNEL_OK")
</pallas_src>

<mosaic_0001>
module attributes {stable_mosaic.version = 11 : i64} {
  func.func @gcn_stage1_kernel(%arg0: i32, %arg1: i32, %arg2: i32, %arg3: memref<1x8x8xf32, #tpu.memory_space<vmem>>, %arg4: memref<1x8x128xf32, #tpu.memory_space<vmem>>, %arg5: memref<128x128xf32, #tpu.memory_space<vmem>>, %arg6: memref<1x8x128xbf16, #tpu.memory_space<vmem>>, %arg7: memref<1x1x2x128xf32, #tpu.memory_space<vmem>>, %arg8: memref<1x8x128xf32, #tpu.memory_space<vmem>>) attributes {dimension_semantics = [#tpu.dimension_semantics<parallel>, #tpu.dimension_semantics<parallel>, #tpu.dimension_semantics<arbitrary>], iteration_bounds = array<i64: 2, 1, 1>, scalar_prefetch = 0 : i64, scratch_operands = 1 : i64, tpu.core_type = #tpu.core_type<tc>, window_params = [{transform_indices = @transform_0, window_bounds = array<i64: 1, 8, 8>}, {transform_indices = @transform_1, window_bounds = array<i64: 1, 8, 128>}, {pipeline_mode = #tpu.pipeline_mode<synchronous>, transform_indices = @transform_2, window_bounds = array<i64: 128, 128>}, {transform_indices = @transform_3, window_bounds = array<i64: 1, 8, 128>}, {transform_indices = @transform_4, window_bounds = array<i64: 1, 1, 2, 128>}]} {
    %c0_i32 = arith.constant 0 : i32
    %0 = arith.cmpi eq, %arg2, %c0_i32 : i32
    %1 = arith.extui %0 : i1 to i32
    %c0_i32_0 = arith.constant 0 : i32
    %2 = arith.cmpi ne, %1, %c0_i32_0 : i32
    scf.if %2 {
      %cst_13 = arith.constant 0.000000e+00 : f32
      %17 = vector.broadcast %cst_13 : f32 to vector<1x8x128xf32>
      %c0_14 = arith.constant 0 : index
      %c0_15 = arith.constant 0 : index
      %c0_16 = arith.constant 0 : index
      %18 = vector.load %arg8[%c0_14, %c0_15, %c0_16] : memref<1x8x128xf32, #tpu.memory_space<vmem>>, vector<1x8x128xf32>
      tpu.vector_store %arg8[%c0_14, %c0_15, %c0_16], %17 {strides = array<i32>} : memref<1x8x128xf32, #tpu.memory_space<vmem>>, vector<1x8x128xf32>,
    } else {
    }
    %c0 = arith.constant 0 : index
    %c0_1 = arith.constant 0 : index
    %c0_2 = arith.constant 0 : index
    %3 = vector.load %arg3[%c0, %c0_1, %c0_2] : memref<1x8x8xf32, #tpu.memory_space<vmem>>, vector<1x8x8xf32>
    %4 = arith.truncf %3 : vector<1x8x8xf32> to vector<1x8x8xbf16>
    %c8_i32 = arith.constant 8 : i32
    %5 = arith.muli %arg2, %c8_i32 : i32
    %6 = tpu.assume_multiple %5, 8 : i32
    %c0_3 = arith.constant 0 : index
    %7 = arith.index_cast %6 : i32 to index
    %c0_4 = arith.constant 0 : index
    %8 = vector.load %arg4[%c0_3, %7, %c0_4] : memref<1x8x128xf32, #tpu.memory_space<vmem>>, vector<1x8x128xf32>
    %9 = arith.truncf %8 : vector<1x8x128xf32> to vector<1x8x128xbf16>
    %c0_5 = arith.constant 0 : index
    %c0_6 = arith.constant 0 : index
    %c0_7 = arith.constant 0 : index
    %10 = vector.load %arg8[%c0_5, %c0_6, %c0_7] : memref<1x8x128xf32, #tpu.memory_space<vmem>>, vector<1x8x128xf32>
    "tpu.trace_start"() <{level = 10 : i32, message = "bij,bjf->bif"}> : () -> ()
    %cst = arith.constant dense<0.000000e+00> : vector<1x8x128xf32>
    %11 = tpu.matmul %4, %9, %cst {dimension_numbers = #tpu.dot_dimension_numbers<[2], [1], [1], [2], [0, 0, 0, 1, 1, 2], [0], [0]>} : vector<1x8x8xbf16>, vector<1x8x128xbf16>, vector<1x8x128xf32> -> vector<1x8x128xf32>
    "tpu.trace_stop"() : () -> ()
    %12 = arith.addf %10, %11 : vector<1x8x128xf32>
    %c0_8 = arith.constant 0 : index
    %c0_9 = arith.constant 0 : index
    %c0_10 = arith.constant 0 : index
    %13 = vector.load %arg8[%c0_8, %c0_9, %c0_10] : memref<1x8x128xf32, #tpu.memory_space<vmem>>, vector<1x8x128xf32>
    tpu.vector_store %arg8[%c0_8, %c0_9, %c0_10], %12 {strides = array<i32>} : memref<1x8x128xf32, #tpu.memory_space<vmem>>, vector<1x8x128xf32>,
    %c0_i32_11 = arith.constant 0 : i32
    %14 = arith.cmpi eq, %arg2, %c0_i32_11 : i32
    %15 = arith.extui %14 : i1 to i32
    %c0_i32_12 = arith.constant 0 : i32
    %16 = arith.cmpi ne, %15, %c0_i32_12 : i32
    scf.if %16 {
      %c0_13 = arith.constant 0 : index
      %c0_14 = arith.constant 0 : index
      %c0_15 = arith.constant 0 : index
      %17 = vector.load %arg8[%c0_13, %c0_14, %c0_15] : memref<1x8x128xf32, #tpu.memory_space<vmem>>, vector<1x8x128xf32>
      %18 = vector.shape_cast %17 : vector<1x8x128xf32> to vector<8x128xf32>
      %c0_16 = arith.constant 0 : index
      %c0_17 = arith.constant 0 : index
      %19 = vector.load %arg5[%c0_16, %c0_17] : memref<128x128xf32, #tpu.memory_space<vmem>>, vector<128x128xf32>
      %cst_18 = arith.constant dense<0.000000e+00> : vector<8x128xf32>
      %20 = tpu.matmul %18, %19, %cst_18 {dimension_numbers = #tpu.dot_dimension_numbers<[1], [0], [0], [1], [0, 0, 1, 1], [], []>} : vector<8x128xf32>, vector<128x128xf32>, vector<8x128xf32> -> vector<8x128xf32>
      %21 = vector.shape_cast %20 : vector<8x128xf32> to vector<1x8x128xf32>
      %22 = arith.truncf %21 : vector<1x8x128xf32> to vector<1x8x128xbf16>
      %c0_19 = arith.constant 0 : index
      %c0_20 = arith.constant 0 : index
      %c0_21 = arith.constant 0 : index
      %23 = vector.load %arg6[%c0_19, %c0_20, %c0_21] : memref<1x8x128xbf16, #tpu.memory_space<vmem>>, vector<1x8x128xbf16>
      tpu.vector_store %arg6[%c0_19, %c0_20, %c0_21], %22 {strides = array<i32>} : memref<1x8x128xbf16, #tpu.memory_space<vmem>>, vector<1x8x128xbf16>,
      %cst_22 = arith.constant dense<0.000000e+00> : vector<128xf32>
      %24 = vector.multi_reduction <add>, %20, %cst_22 [0] : vector<8x128xf32> to vector<128xf32>
      %25 = vector.shape_cast %24 : vector<128xf32> to vector<1x128xf32>
      %26 = arith.mulf %20, %20 : vector<8x128xf32>
      %cst_23 = arith.constant dense<0.000000e+00> : vector<128xf32>
      %27 = vector.multi_reduction <add>, %26, %cst_23 [0] : vector<8x128xf32> to vector<128xf32>
      %28 = vector.shape_cast %27 : vector<128xf32> to vector<1x128xf32>
      %29 = tpu.concatenate %25, %28 in 0 : vector<1x128xf32>, vector<1x128xf32> -> vector<2x128xf32>
      %30 = vector.shape_cast %29 : vector<2x128xf32> to vector<1x1x2x128xf32>
      %c0_24 = arith.constant 0 : index
      %c0_25 = arith.constant 0 : index
      %c0_26 = arith.constant 0 : index
      %c0_27 = arith.constant 0 : index
      %31 = vector.load %arg7[%c0_24, %c0_25, %c0_26, %c0_27] : memref<1x1x2x128xf32, #tpu.memory_space<vmem>>, vector<1x1x2x128xf32>
      tpu.vector_store %arg7[%c0_24, %c0_25, %c0_26, %c0_27], %30 {strides = array<i32>} : memref<1x1x2x128xf32, #tpu.memory_space<vmem>>, vector<1x1x2x128xf32>,
    } else {
    }
    return
  }
  func.func @transform_0(%arg0: i32, %arg1: i32, %arg2: i32) -> (i32, i32, i32) {
    %c0_i32 = arith.constant 0 : i32
    return %arg0, %arg1, %arg2 : i32, i32, i32
  }
  func.func @transform_1(%arg0: i32, %arg1: i32, %arg2: i32) -> (i32, i32, i32) {
    %c0_i32 = arith.constant 0 : i32
    %c0_i32_0 = arith.constant 0 : i32
    %c0_i32_1 = arith.constant 0 : i32
    return %arg0, %c0_i32, %c0_i32_0 : i32, i32, i32
  }
  func.func @transform_2(%arg0: i32, %arg1: i32, %arg2: i32) -> (i32, i32) {
    %c0_i32 = arith.constant 0 : i32
    %c0_i32_0 = arith.constant 0 : i32
    %c0_i32_1 = arith.constant 0 : i32
    return %c0_i32, %c0_i32_0 : i32, i32
  }
  func.func @transform_3(%arg0: i32, %arg1: i32, %arg2: i32) -> (i32, i32, i32) {
    %c0_i32 = arith.constant 0 : i32
    %c0_i32_0 = arith.constant 0 : i32
    return %arg0, %arg1, %c0_i32 : i32, i32, i32
  }
  func.func @transform_4(%arg0: i32, %arg1: i32, %arg2: i32) -> (i32, i32, i32, i32) {
    %c0_i32 = arith.constant 0 : i32
    %c0_i32_0 = arith.constant 0 : i32
    %c0_i32_1 = arith.constant 0 : i32
    return %arg0, %arg1, %c0_i32, %c0_i32_0 : i32, i32, i32, i32
  }
}

</mosaic_0001>

<llo_original>
// kernel: tpu_custom_call.1
$region0: #{tpu_custom_call.1}
  #allocation0 [shape = 'u32[]', space=smem, size = 0x4, offset = 0x4, fixed_abs, tag = 'smem constant byte address 0x4 - core index']
  #allocation1 [shape = 'u32[72,128]{1,0:T(1,128)}', space=vmem, size = 0x9000, scoped, tag = 'internal scratch']
  #allocation2 [shape = 'f32[1,8,128]{2,1,0:T(8,128)}', space=vmem, size = 0x1000, scoped, tag = 'scratch operand']
  %s0 = inlined_call_operand.hbm [shape: f32[2,8,8], index: 0, kind: input, shape index: {}]
  %s1 = inlined_call_operand.hbm [shape: f32[2,8,128], index: 1, kind: input, shape index: {}]
  %s2 = inlined_call_operand.hbm [shape: f32[128,128], index: 2, kind: input, shape index: {}]
  %s3 = inlined_call_operand.hbm [shape: bf16[2,8,128], index: 3, kind: output, shape index: {0}]
  %s4 = inlined_call_operand.hbm [shape: f32[2,1,2,128], index: 4, kind: output, shape index: {1}]
  %5 = xla_tuple %s3, %s4
  %s6 = sld [smem:[#allocation0]]
  $region73: #{tpu_custom_call.1} parent=0
    _
  %s8 = ssub.s32 1, %s6
  %s9 = scalar_select 0, %s8, %s6
  $region1: #{tpu_custom_call.1} parent=0
    #allocation3 [shape = 'u8[8192]{0}', space=vmem, size = 0x2000, scoped, tag = 'input window, operand 0']
    #allocation4 [shape = 's32[2]{0}', space=sflag, size = 0x8, scoped, tag = 'scoped memory for tpu_custom_call.1']
    #allocation5 [shape = 's32[2]{0}', space=sflag, size = 0x8, scoped, tag = 'scoped memory for tpu_custom_call.1']
    #allocation6 [shape = 'u8[8192]{0}', space=vmem, size = 0x2000, scoped, tag = 'input window, operand 1']
    #allocation7 [shape = 's32[2]{0}', space=sflag, size = 0x8, scoped, tag = 'scoped memory for tpu_custom_call.1']
    #allocation8 [shape = 'u8[65536]{0}', space=vmem, size = 0x10000, scoped, tag = 'input window, operand 2, single buffered']
    #allocation9 [shape = 'u8[4096]{0}', space=vmem, size = 0x1000, scoped, tag = 'output window, operand 0']
    #allocation10 [shape = 'u8[2048]{0}', space=vmem, size = 0x800, scoped, tag = 'output window, operand 1']
    #allocation11 [shape = 's32[2]{0}', space=sflag, size = 0x8, scoped, tag = 'scoped memory for tpu_custom_call.1']
    %10 = vsyncpa [#allocation4], 0
    %s11 = scalar_lea.sflag [#allocation4], 1
    %12 = vsyncpa %s11, 0
    %13 = vsyncpa [#allocation7], 0
    %s14 = scalar_lea.sflag [#allocation7], 1
    %15 = vsyncpa %s14, 0
    %16 = vsyncpa [#allocation5], 0
    %s17 = scalar_lea.sflag [#allocation5], 1
    %18 = vsyncpa %s17, 0
    %19 = vsyncpa [#allocation11], 0
    %s20 = scalar_lea.sflag [#allocation11], 1
    %21 = vsyncpa %s20, 0
    loop: start=0, step=1, limit=4
    $region2: #{tpu_custom_call.1} parent=1 // loop_pre_header
      _
    $region3: #{tpu_custom_call.1} parent=1 // loop_header
      %s23 = sphi 0, %s27
      %p24 = scmp.ge.s32.totalorder %s23, 4
      %s30 = sphi 0, %s49
      %s31 = sphi 0, %s45
      %s32 = sphi 0, %s41
      %s33 = sphi 0, %s30
      %s34 = sphi 0, %s31
      %s35 = sphi 0, %s32
      %s36 = sphi 0, %s33
      %s37 = sphi 0, %s34
      %s38 = sphi 0, %s35
      %s56 = sphi 0, %s58
      %s59 = sphi 0, %s56
      %s60 = sphi 0, %s59
      %s76 = sphi 0, %s60
      %s82 = sphi 0, %s84
      %s85 = sphi 0, %s82
      %s86 = sphi 0, %s85
      %s102 = sphi 0, %s86
      %s106 = sphi 0, %s106
      %s108 = sphi 0, %s106
      %s109 = sphi 0, %s108
      %s123 = sphi 0, %s109
      %s131 = sphi 0, %s133
      %s134 = sphi 0, %s131
      %s135 = sphi 0, %s134
      %s151 = sphi 0, %s135
      %s159 = sphi 0, %s161
      %s162 = sphi 0, %s159
      %s163 = sphi 0, %s162
      %s179 = sphi 0, %s163
    $region4: #{tpu_custom_call.1} parent=1 // loop_header_branch
      %26 = sbr.rel (%p24) target = $region8
    $region5: #{tpu_custom_call.1} parent=1 // loop_body
      %s28 = ssub.s32 %s23, 1
      %s29 = ssub.s32 %s23, 2
      %s39 = sadd.s32 1, %s32
      %p40 = scmp.ge.s32.totalorder %s39, 1
      %s41 = scalar_select %p40, 0, %s39
      %s42 = sadd.s32 1, %s31
      %s43 = scalar_select %p40, %s42, %s31
      %p44 = scmp.ge.s32.totalorder %s43, 1
      %s45 = scalar_select %p44, 0, %s43
      %s46 = sadd.s32 1, %s30
      %s47 = scalar_select %p44, %s46, %s30
      %p48 = scmp.ge.s32.totalorder %s47, 2
      %s49 = scalar_select %p48, 0, %s47
      %s50 = ssub.s32 %s30, %s49
      %s51 = ssub.s32 %s31, %s45
      %s52 = sor.u32 %s50, %s51
      %s53 = ssub.s32 %s32, %s41
      %s54 = sor.u32 %s52, %s53
      %p55 = scmp.eq.s32.totalorder %s54, 0
      %s57 = sadd.s32 %s56, 1
      %s58 = scalar_select %p55, %s56, %s57
      %p61 = pneg %p55
      %p62 = scmp.eq.s32.totalorder %s23, 1
      %p63 = por %p61, %p62
      %p64 = scmp.ne.s32.totalorder %s56, %s59
      %p65 = scmp.eq.s32.totalorder %s23, 0
      %p66 = por %p64, %p65
      %p67 = scmp.ne.s32.totalorder %s56, %s59
      %p68 = scmp.eq.s32.totalorder %s28, 1
      %p69 = por %p67, %p68
      %p70 = scmp.ne.s32.totalorder %s59, %s60
      %p71 = scmp.eq.s32.totalorder %s28, 0
      %p72 = por %p70, %p71
      %p73 = scmp.ne.s32.totalorder %s59, %s60
      %p74 = scmp.eq.s32.totalorder %s29, 1
      %p75 = por %p73, %p74
      %p77 = scmp.ne.s32.totalorder %s60, %s76
      %p78 = scmp.eq.s32.totalorder %s29, 0
      %p79 = por %p77, %p78
      %s80 = ssub.s32 %s30, %s49
      %p81 = scmp.eq.s32.totalorder %s80, 0
      %s83 = sadd.s32 %s82, 1
      %s84 = scalar_select %p81, %s82, %s83
      %p87 = pneg %p81
      %p88 = scmp.eq.s32.totalorder %s23, 1
      %p89 = por %p87, %p88
      %p90 = scmp.ne.s32.totalorder %s82, %s85
      %p91 = scmp.eq.s32.totalorder %s23, 0
      %p92 = por %p90, %p91
      %p93 = scmp.ne.s32.totalorder %s82, %s85
      %p94 = scmp.eq.s32.totalorder %s28, 1
      %p95 = por %p93, %p94
      %p96 = scmp.ne.s32.totalorder %s85, %s86
      %p97 = scmp.eq.s32.totalorder %s28, 0
      %p98 = por %p96, %p97
      %p99 = scmp.ne.s32.totalorder %s85, %s86
      %p100 = scmp.eq.s32.totalorder %s29, 1
      %p101 = por %p99, %p100
      %p103 = scmp.ne.s32.totalorder %s86, %s102
      %p104 = scmp.eq.s32.totalorder %s29, 0
      %p105 = por %p103, %p104
      %s107 = sadd.s32 %s106, 1
      %p110 = scmp.eq.s32.totalorder %s23, 1
      %p111 = scmp.ne.s32.totalorder %s106, %s108
      %p112 = scmp.eq.s32.totalorder %s23, 0
      %p113 = por %p111, %p112
      %p114 = scmp.ne.s32.totalorder %s106, %s108
      %p115 = scmp.eq.s32.totalorder %s28, 1
      %p116 = por %p114, %p115
      %p117 = scmp.ne.s32.totalorder %s108, %s109
      %p118 = scmp.eq.s32.totalorder %s28, 0
      %p119 = por %p117, %p118
      %p120 = scmp.ne.s32.totalorder %s108, %s109
      %p121 = scmp.eq.s32.totalorder %s29, 1
      %p122 = por %p120, %p121
      %p124 = scmp.ne.s32.totalorder %s109, %s123
      %p125 = scmp.eq.s32.totalorder %s29, 0
      %p126 = por %p124, %p125
      %s127 = ssub.s32 %s30, %s49
      %s128 = ssub.s32 %s31, %s45
      %s129 = sor.u32 %s127, %s128
      %p130 = scmp.eq.s32.totalorder %s129, 0
      %s132 = sadd.s32 %s131, 1
      %s133 = scalar_select %p130, %s131, %s132
      %p136 = pneg %p130
      %p137 = scmp.eq.s32.totalorder %s23, 1
      %p138 = por %p136, %p137
      %p139 = scmp.ne.s32.totalorder %s131, %s134
      %p140 = scmp.eq.s32.totalorder %s23, 0
      %p141 = por %p139, %p140
      %p142 = scmp.ne.s32.totalorder %s131, %s134
      %p143 = scmp.eq.s32.totalorder %s28, 1
      %p144 = por %p142, %p143
      %p145 = scmp.ne.s32.totalorder %s134, %s135
      %p146 = scmp.eq.s32.totalorder %s28, 0
      %p147 = por %p145, %p146
      %p148 = scmp.ne.s32.totalorder %s134, %s135
      %p149 = scmp.eq.s32.totalorder %s29, 1
      %p150 = por %p148, %p149
      %p152 = scmp.ne.s32.totalorder %s135, %s151
      %p153 = scmp.eq.s32.totalorder %s29, 0
      %p154 = por %p152, %p153
      %s155 = ssub.s32 %s30, %s49
      %s156 = ssub.s32 %s31, %s45
      %s157 = sor.u32 %s155, %s156
      %p158 = scmp.eq.s32.totalorder %s157, 0
      %s160 = sadd.s32 %s159, 1
      %s161 = scalar_select %p158, %s159, %s160
      %p164 = pneg %p158
      %p165 = scmp.eq.s32.totalorder %s23, 1
      %p166 = por %p164, %p165
      %p167 = scmp.ne.s32.totalorder %s159, %s162
      %p168 = scmp.eq.s32.totalorder %s23, 0
      %p169 = por %p167, %p168
      %p170 = scmp.ne.s32.totalorder %s159, %s162
      %p171 = scmp.eq.s32.totalorder %s28, 1
      %p172 = por %p170, %p171
      %p173 = scmp.ne.s32.totalorder %s162, %s163
      %p174 = scmp.eq.s32.totalorder %s28, 0
      %p175 = por %p173, %p174
      %p176 = scmp.ne.s32.totalorder %s162, %s163
      %p177 = scmp.eq.s32.totalorder %s29, 1
      %p178 = por %p176, %p177
      %p180 = scmp.ne.s32.totalorder %s163, %s179
      %p181 = scmp.eq.s32.totalorder %s29, 0
      %p182 = por %p180, %p181
      %p183 = scmp.le.s32.totalorder 1, %s23
      %p184 = scmp.lt.s32.totalorder %s23, 3
      %p185 = pnand %p183, %p184
      %p186 = pneg %p185
      // Predicated region
      $region9: #{tpu_custom_call.1} parent=5 // pred_check
        _
      $region10: #{tpu_custom_call.1} parent=5 // pred_check_branch
        %188 = sbr.rel (%p185) target = $region12
      $region11: #{tpu_custom_call.1} parent=5 // pred_region
        %s189 = ssub.s32 %s23, 1
        // Predicated region
        $region13: #{tpu_custom_call.1} parent=11 // pred_check
          %p190 = pneg %p119
        $region14: #{tpu_custom_call.1} parent=11 // pred_check_branch
          %192 = sbr.rel (%p190) target = $region16
        $region15: #{tpu_custom_call.1} parent=11 // pred_region
          %194 = vsyncadd [#allocation7], 0
          %s195 = sshll.u32 %s2, 4
          %s196 = int_to_ptr.hbm [resolvable:$true] %s195
          %s197 = sshll.u32 [#allocation8], 4
          %s198 = int_to_ptr.vmem [resolvable:$true] %s197
          %203 = dma.hbm_to_vmem [thread:$0]  %s196, 2048, %s198, [#allocation7], 128, 128, 8
        $region16: #{tpu_custom_call.1} parent=11 // pred_fallthru
          _
      $region12: #{tpu_custom_call.1} parent=5 // pred_fallthru
        _
      %p204 = scmp.lt.s32.totalorder %s23, 2
      // Predicated region
      $region17: #{tpu_custom_call.1} parent=5 // pred_check
        %p205 = pneg %p204
      $region18: #{tpu_custom_call.1} parent=5 // pred_check_branch
        %207 = sbr.rel (%p205) target = $region20
      $region19: #{tpu_custom_call.1} parent=5 // pred_region
        // Predicated region
        $region21: #{tpu_custom_call.1} parent=19 // pred_check
          %p208 = pneg %p66
        $region22: #{tpu_custom_call.1} parent=19 // pred_check_branch
          %210 = sbr.rel (%p208) target = $region24
        $region23: #{tpu_custom_call.1} parent=19 // pred_region
          %s211 = sand.u32 %s56, 1
          %s212 = scalar_lea.sflag [#allocation4], %s211
          %s213 = sand.u32 %s56, 1
          %s214 = smul.addr %s213, 8
          %s215 = scalar_lea.vmem [#allocation3], %s214
          %217 = vsyncadd %s212, 0
          %s218 = sadd.s32 %s32, %s31
          %s219 = sadd.s32 %s218, %s30
          %s220 = smul.addr %s219, 8
          %s221 = scalar_lea.hbm %s0, %s220
          %s223 = sshll.u32 %s221, 4
          %s224 = int_to_ptr.hbm [resolvable:$true] %s223
          %s225 = sshll.u32 %s215, 4
          %s226 = int_to_ptr.vmem [resolvable:$true] %s225
          %228 = dma.hbm_to_vmem [thread:$0]  %s224, 128, %s226, %s212
        $region24: #{tpu_custom_call.1} parent=19 // pred_fallthru
          _
        // Predicated region
        $region25: #{tpu_custom_call.1} parent=19 // pred_check
          %p229 = pneg %p92
        $region26: #{tpu_custom_call.1} parent=19 // pred_check_branch
          %231 = sbr.rel (%p229) target = $region28
        $region27: #{tpu_custom_call.1} parent=19 // pred_region
          %s232 = sand.u32 %s23, 1
          %s233 = scalar_lea.sflag [#allocation7], %s232
          %s234 = sand.u32 %s82, 1
          %s235 = smul.addr %s234, 8
          %s236 = scalar_lea.vmem [#allocation6], %s235
          %238 = vsyncadd %s233, 0
          %s239 = smul.addr %s30, 8
          %s240 = scalar_lea.hbm %s1, %s239
          %s242 = sshll.u32 %s240, 4
          %s243 = int_to_ptr.hbm [resolvable:$true] %s242
          %s244 = sshll.u32 %s236, 4
          %s245 = int_to_ptr.vmem [resolvable:$true] %s244
          %247 = dma.hbm_to_vmem [thread:$0]  %s243, 128, %s245, %s233
        $region28: #{tpu_custom_call.1} parent=19 // pred_fallthru
          _
      $region20: #{tpu_custom_call.1} parent=5 // pred_fallthru
        _
      %p248 = scmp.le.s32.totalorder 1, %s23
      %p249 = scmp.lt.s32.totalorder %s23, 3
      %p250 = pnand %p248, %p249
      %p251 = pneg %p250
      // Predicated region
      $region29: #{tpu_custom_call.1} parent=5 // pred_check
        _
      $region30: #{tpu_custom_call.1} parent=5 // pred_check_branch
        %253 = sbr.rel (%p250) target = $region32
      $region31: #{tpu_custom_call.1} parent=5 // pred_region
        %s254 = ssub.s32 %s23, 1
        %s255 = sand.u32 %s59, 1
        %s256 = scalar_lea.sflag [#allocation4], %s255
        %s257 = sand.u32 %s59, 1
        %s258 = smul.addr %s257, 8
        %s259 = scalar_lea.vmem [#allocation3], %s258
        // Predicated region
        $region33: #{tpu_custom_call.1} parent=31 // pred_check
          %p260 = pneg %p72
        $region34: #{tpu_custom_call.1} parent=31 // pred_check_branch
          %262 = sbr.rel (%p260) target = $region36
        $region35: #{tpu_custom_call.1} parent=31 // pred_region
          %264 = dma.done %s256, 128
        $region36: #{tpu_custom_call.1} parent=31 // pred_fallthru
          _
        %s265 = sand.u32 %s28, 1
        %s266 = scalar_lea.sflag [#allocation7], %s265
        %s267 = sand.u32 %s85, 1
        %s268 = smul.addr %s267, 8
        %s269 = scalar_lea.vmem [#allocation6], %s268
        // Predicated region
        $region37: #{tpu_custom_call.1} parent=31 // pred_check
          %p270 = pneg %p98
        $region38: #{tpu_custom_call.1} parent=31 // pred_check_branch
          %272 = sbr.rel (%p270) target = $region40
        $region39: #{tpu_custom_call.1} parent=31 // pred_region
          %274 = dma.done %s266, 128
        $region40: #{tpu_custom_call.1} parent=31 // pred_fallthru
          _
        // Predicated region
        $region41: #{tpu_custom_call.1} parent=31 // pred_check
          %p275 = pneg %p119
        $region42: #{tpu_custom_call.1} parent=31 // pred_check_branch
          %277 = sbr.rel (%p275) target = $region44
        $region43: #{tpu_custom_call.1} parent=31 // pred_region
          %279 = dma.done [#allocation7], 2048
        $region44: #{tpu_custom_call.1} parent=31 // pred_fallthru
          _
        %s280 = sand.u32 %s59, 1
        %s281 = scalar_lea.sflag [#allocation4], %s280
        %s282 = sand.u32 %s59, 1
        %s283 = smul.addr %s282, 8
        %s284 = scalar_lea.vmem [#allocation3], %s283
        %p285 = pneg %p72
        %p286 = pneg %p69
        %s287 = sand.u32 %s28, 1
        %s288 = scalar_lea.sflag [#allocation7], %s287
        %s289 = sand.u32 %s85, 1
        %s290 = smul.addr %s289, 8
        %s291 = scalar_lea.vmem [#allocation6], %s290
        %p292 = pneg %p98
        %p293 = pneg %p95
        %p294 = pneg %p119
        %p295 = pneg %p116
        %p296 = pneg %p147
        %p297 = pneg %p144
        %s298 = sand.u32 %s134, 1
        %s299 = scalar_lea.sflag [#allocation5], %s298
        %s300 = sand.u32 %s134, 1
        %s301 = smul.addr %s300, 4
        %s302 = scalar_lea.vmem [#allocation9], %s301
        %p303 = pneg %p175
        %p304 = pneg %p172
        %s305 = sand.u32 %s162, 1
        %s306 = scalar_lea.sflag [#allocation11], %s305
        %s307 = sand.u32 %s162, 1
        %s308 = smul.addr %s307, 2
        %s309 = scalar_lea.vmem [#allocation10], %s308
        %p311 = scmp.eq.s32.totalorder %s35, 0
        // Predicated region
        $region45: #{tpu_custom_call.1} parent=31 // pred_check
          %p312 = pneg %p311
        $region46: #{tpu_custom_call.1} parent=31 // pred_check_branch
          %314 = sbr.rel (%p312) target = $region48
        $region47: #{tpu_custom_call.1} parent=31 // pred_region
          %315 = vst [vmem:[#allocation2] sm:$0xff] 0.0
        $region48: #{tpu_custom_call.1} parent=31 // pred_fallthru
          _
        %v316 = vld [vmem:[%s259] sm:$0xff]
        %v317 = vpack.c.bf16 %v316, %v316
        %s318 = smul.u32 %s35, 8
        %s319 = scalar_lea.vmem %s269, %s318 [#allocation6]
        %v320 = vld [vmem:[%s319] sm:$0xff]
        %v321 = vpack.c.bf16 %v320, %v320
        %v322 = vld [vmem:[#allocation2] sm:$0xff]
        %vm323 = vcmask 64512
        %v325 = vsel %vm323, %v317, 0
        %vm327 = vcmask 1043456
        %v329 = vsel %vm327, %v321, 0
        %331 = vmatpush.bf16.msra.mxu0 0
        %332 = vmatpush.bf16.msra.mxu0 0
        %333 = vmatpush.bf16.msra.mxu0 0
        %334 = vmatpush.bf16.msra.mxu0 0
        %335 = vmatpush.bf16.msra.mxu0 0
        %336 = vmatpush.bf16.msra.mxu0 0
        %337 = vmatpush.bf16.msra.mxu0 0
        %338 = vmatpush.bf16.msra.mxu0 %v329
        %339 = vmatmul.bf16.gmra.mxu0 %v325
        %v340 = vpop.f32.mrf.mxu0
        %v341 = vadd.f32 0.0, %v340
        %v342 = vpop.f32.mrf.mxu0
        %343 = vdwg.mxu0
        %v344 = vadd.f32 %v322, %v341
        %345 = vst [vmem:[#allocation2] sm:$0xff] %v344
        // Predicated region
        $region49: #{tpu_custom_call.1} parent=31 // pred_check
          %p346 = pneg %p311
        $region50: #{tpu_custom_call.1} parent=31 // pred_check_branch
          %348 = sbr.rel (%p346) target = $region52
        $region51: #{tpu_custom_call.1} parent=31 // pred_region
          %v349 = vld [vmem:[#allocation2] sm:$0xff]
          %v350 = vld [vmem:[#allocation8] sm:$0xff]
          %v351 = vld [vmem:[#allocation8 + $0x8] sm:$0xff]
          %v352 = vld [vmem:[#allocation8 + $0x10] sm:$0xff]
          %v353 = vld [vmem:[#allocation8 + $0x18] sm:$0xff]
          %v354 = vld [vmem:[#allocation8 + $0x20] sm:$0xff]
          %v355 = vld [vmem:[#allocation8 + $0x28] sm:$0xff]
          %v356 = vld [vmem:[#allocation8 + $0x30] sm:$0xff]
          %v357 = vld [vmem:[#allocation8 + $0x38] sm:$0xff]
          %v358 = vld [vmem:[#allocation8 + $0x40] sm:$0xff]
          %v359 = vld [vmem:[#allocation8 + $0x48] sm:$0xff]
          %v360 = vld [vmem:[#allocation8 + $0x50] sm:$0xff]
          %v361 = vld [vmem:[#allocation8 + $0x58] sm:$0xff]
          %v362 = vld [vmem:[#allocation8 + $0x60] sm:$0xff]
          %v363 = vld [vmem:[#allocation8 + $0x68] sm:$0xff]
          %v364 = vld [vmem:[#allocation8 + $0x70] sm:$0xff]
          %v365 = vld [vmem:[#allocation8 + $0x78] sm:$0xff]
          %366 = vmatpush.msra.mxu0 %v365
          %367 = vmatpush.msra.mxu0 %v364
          %368 = vmatpush.msra.mxu0 %v363
          %369 = vmatpush.msra.mxu0 %v362
          %370 = vmatpush.msra.mxu0 %v361
          %371 = vmatpush.msra.mxu0 %v360
          %372 = vmatpush.msra.mxu0 %v359
          %373 = vmatpush.msra.mxu0 %v358
          %374 = vmatpush.msra.mxu0 %v357
          %375 = vmatpush.msra.mxu0 %v356
          %376 = vmatpush.msra.mxu0 %v355
          %377 = vmatpush.msra.mxu0 %v354
          %378 = vmatpush.msra.mxu0 %v353
          %379 = vmatpush.msra.mxu0 %v352
          %380 = vmatpush.msra.mxu0 %v351
          %381 = vmatpush.msra.mxu0 %v350
          %382 = vmatmul.f32.gmra.mxu0 %v349
          %v383 = vpop.f32.mrf.mxu0
          %v384 = vadd.f32 0.0, %v383
          %385 = vdwg.mxu0
          %v386 = vpack.c.bf16 %v384, %v384
          %387 = vst [vmem:[%s302] sm:$0xf] %v386
          %v388 = vrot.slane %v384, 4
          %v389 = vadd.f32 %v384, %v388
          %v390 = vrot.slane %v389, 2
          %v391 = vadd.f32 %v389, %v390
          %v392 = vrot.slane %v391, 1
          %v393 = vadd.f32 %v391, %v392
          %v394 = vmul.f32 %v384, %v384
          %v395 = vrot.slane %v394, 4
          %v396 = vadd.f32 %v394, %v395
          %v397 = vrot.slane %v396, 2
          %v398 = vadd.f32 %v396, %v397
          %v399 = vrot.slane %v398, 1
          %v400 = vadd.f32 %v398, %v399
          %vm401 = vcmask 1040384
          %v402 = vsel %vm401, %v393, %v400
          %403 = vst [vmem:[%s309] sm:$0x3] %v402
        $region52: #{tpu_custom_call.1} parent=31 // pred_fallthru
          _
        %s404 = sand.u32 %s134, 1
        %s405 = scalar_lea.sflag [#allocation5], %s404
        %s406 = sand.u32 %s134, 1
        %s407 = smul.addr %s406, 4
        %s408 = scalar_lea.vmem [#allocation9], %s407
        %s409 = sand.u32 %s162, 1
        %s410 = scalar_lea.sflag [#allocation11], %s409
        %s411 = sand.u32 %s162, 1
        %s412 = smul.addr %s411, 2
        %s413 = scalar_lea.vmem [#allocation10], %s412
        // Predicated region
        $region53: #{tpu_custom_call.1} parent=31 // pred_check
          %p414 = pneg %p144
        $region54: #{tpu_custom_call.1} parent=31 // pred_check_branch
          %416 = sbr.rel (%p414) target = $region56
        $region55: #{tpu_custom_call.1} parent=31 // pred_region
          %418 = vsyncadd %s405, 0
          %s419 = sadd.s32 %s34, %s33
          %s420 = smul.addr %s419, 4
          %s421 = scalar_lea.hbm %s3, %s420
          %s423 = sshll.u32 %s408, 4
          %s424 = int_to_ptr.vmem [resolvable:$true] %s423
          %s425 = sshll.u32 %s421, 4
          %s426 = int_to_ptr.hbm [resolvable:$true] %s425
          %428 = dma.vmem_to_hbm [thread:$0]  %s424, 64, %s426, %s405
        $region56: #{tpu_custom_call.1} parent=31 // pred_fallthru
          _
        // Predicated region
        $region57: #{tpu_custom_call.1} parent=31 // pred_check
          %p429 = pneg %p172
        $region58: #{tpu_custom_call.1} parent=31 // pred_check_branch
          %431 = sbr.rel (%p429) target = $region60
        $region59: #{tpu_custom_call.1} parent=31 // pred_region
          %433 = vsyncadd %s410, 0
          %s434 = sadd.s32 %s34, %s33
          %s435 = smul.addr %s434, 2
          %s436 = scalar_lea.hbm %s4, %s435
          %s438 = sshll.u32 %s413, 4
          %s439 = int_to_ptr.vmem [resolvable:$true] %s438
          %s440 = sshll.u32 %s436, 4
          %s441 = int_to_ptr.hbm [resolvable:$true] %s440
          %443 = dma.vmem_to_hbm [thread:$0]  %s439, 32, %s441, %s410
        $region60: #{tpu_custom_call.1} parent=31 // pred_fallthru
          _
      $region32: #{tpu_custom_call.1} parent=5 // pred_fallthru
        _
      %p444 = scmp.le.s32.totalorder 2, %s23
      // Predicated region
      $region61: #{tpu_custom_call.1} parent=5 // pred_check
        %p445 = pneg %p444
      $region62: #{tpu_custom_call.1} parent=5 // pred_check_branch
        %447 = sbr.rel (%p445) target = $region64
      $region63: #{tpu_custom_call.1} parent=5 // pred_region
        %s448 = ssub.s32 %s23, 2
        // Predicated region
        $region65: #{tpu_custom_call.1} parent=63 // pred_check
          %p449 = pneg %p150
        $region66: #{tpu_custom_call.1} parent=63 // pred_check_branch
          %451 = sbr.rel (%p449) target = $region68
        $region67: #{tpu_custom_call.1} parent=63 // pred_region
          %s452 = sand.u32 %s135, 1
          %s453 = scalar_lea.sflag [#allocation5], %s452
          %s454 = sand.u32 %s135, 1
          %s455 = smul.addr %s454, 4
          %s456 = scalar_lea.vmem [#allocation9], %s455
          %458 = dma.done %s453, 64
        $region68: #{tpu_custom_call.1} parent=63 // pred_fallthru
          _
        // Predicated region
        $region69: #{tpu_custom_call.1} parent=63 // pred_check
          %p459 = pneg %p178
        $region70: #{tpu_custom_call.1} parent=63 // pred_check_branch
          %461 = sbr.rel (%p459) target = $region72
        $region71: #{tpu_custom_call.1} parent=63 // pred_region
          %s462 = sand.u32 %s163, 1
          %s463 = scalar_lea.sflag [#allocation11], %s462
          %s464 = sand.u32 %s163, 1
          %s465 = smul.addr %s464, 2
          %s466 = scalar_lea.vmem [#allocation10], %s465
          %468 = dma.done %s463, 32
        $region72: #{tpu_custom_call.1} parent=63 // pred_fallthru
          _
      $region64: #{tpu_custom_call.1} parent=5 // pred_fallthru
        _
    $region6: #{tpu_custom_call.1} parent=1 // loop_footer
      %s27 = sadd.s32 1, %s23
    $region7: #{tpu_custom_call.1} parent=1 // loop_footer_branch
      %22 = sbr.rel target = $region3
    $region8: #{tpu_custom_call.1} parent=1 // loop_exit
      _
    %469 = vsyncpa [#allocation4], 1
    %s470 = scalar_lea.sflag [#allocation4], 1
    %471 = vsyncpa %s470, 1
    %472 = vsyncpa [#allocation7], 1
    %s473 = scalar_lea.sflag [#allocation7], 1
    %474 = vsyncpa %s473, 1
    %475 = vsyncpa [#allocation5], 1
    %s476 = scalar_lea.sflag [#allocation5], 1
    %477 = vsyncpa %s476, 1
    %478 = vsyncpa [#allocation11], 1
    %s479 = scalar_lea.sflag [#allocation11], 1
    %480 = vsyncpa %s479, 1

</llo_original>
